<compile_context>
chip_gen: v6e
topology: v6e:2x2x1
jax: 0.10.0
libtpu: 0.0.40
codegen_flags: <defaults>
</compile_context>

<pallas_src>
import functools
import math

import numpy as np
import jax
import jax.numpy as jnp
from jax.experimental import pallas as pl
from jax.experimental.pallas import tpu as pltpu


def _pair(v):
    return (v, v) if isinstance(v, int) else tuple(v)


def _round_up(v, m):
    return (v + m - 1) // m * m


def build_input_mask(in_channels, out_channels, kh, kw, k):
    """Mirrors Conv2d._table_input_selections + MaskExpanded.build().

    One k-input LUT table per (out_channel, in_channel, kh, kw); mask rows are grouped
    k-at-a-time per table, each row is a (channel, kh, kw) tap of the conv patch.
    """
    # TODO(synk): deeplut's MaskExpanded picks the (k-1) extra table inputs randomly;
    # here they are chosen deterministically (first of the sorted remaining kernel taps),
    # which also makes the selections identical across output channels (exploited below).
    rows = []
    for _oc in range(out_channels):
        for ic in range(in_channels):
            all_sel = [(ic, a, b) for a in range(kh) for b in range(kw)]
            for a in range(kh):
                for b in range(kw):
                    main = (ic, a, b)
                    subs = sorted(set(all_sel) - {main})
                    rows.append(main)
                    rows.extend(subs[: k - 1])
    return np.asarray(rows, dtype=np.int32)  # (tables_count * k, 3)


def _truth_table(k):
    # (k, 2^k) with entries in {-1, +1}; bit j of column b selects the sign.
    kk = 2 ** k
    return np.asarray(
        [[1.0 if (b >> j) & 1 else -1.0 for b in range(kk)] for j in range(k)],
        dtype=np.float32,
    )


def _monomial_transform(k):
    """M such that a = M @ w maps 2^k Lagrange vertex weights to monomial coefficients.

    f(x) = sum_b w_b * prod_j (1 + x_j*t_jb)/2 = sum_{S subset} a_S * prod_{j in S} x_j,
    with a_S = 2^-k * sum_b w_b * prod_{j in S} t_jb.   Subsets are indexed by bitmask.
    """
    kk = 2 ** k
    M = np.zeros((kk, kk), np.float32)
    for s in range(kk):
        for b in range(kk):
            v = 1.0
            for j in range(k):
                if (s >> j) & 1:
                    v *= 1.0 if (b >> j) & 1 else -1.0
            M[s, b] = v / kk
    return M


def _unfold(x, kernel_size, stride, padding, dilation):
    """torch.nn.Unfold (zeros padding) -> patches (N, P), N=B*OH*OW, P=C_in*KH*KW.

    Output dtype follows x.dtype (cast x to compute_dtype before calling to halve the
    wrapper-side HBM traffic on the bf16 path).
    """
    B, C_in, H, W = x.shape
    KH, KW = kernel_size
    sh, sw = stride
    ph, pw = padding
    dh, dw = dilation
    OH = (H + 2 * ph - dh * (KH - 1) - 1) // sh + 1
    OW = (W + 2 * pw - dw * (KW - 1) - 1) // sw + 1
    x_pad = jnp.pad(x, ((0, 0), (0, 0), (ph, ph), (pw, pw)))
    h_idx = (jnp.arange(OH) * sh)[:, None] + (jnp.arange(KH) * dh)[None, :]  # (OH, KH)
    w_idx = (jnp.arange(OW) * sw)[:, None] + (jnp.arange(KW) * dw)[None, :]  # (OW, KW)
    patches = x_pad[:, :, h_idx[:, None, :, None], w_idx[None, :, None, :]]
    # (B, C_in, OH, OW, KH, KW) -> (B, OH, OW, C_in, KH, KW) -> (N, P)
    patches = patches.transpose(0, 2, 3, 1, 4, 5).reshape(B * OH * OW, C_in * KH * KW)
    return patches, (B, OH, OW, B * OH * OW)


def _prepare_weights(weight, perm, out_channels, P, k, compute_dtype):
    """Fold Lagrange vertex weights -> monomial coefficients, fold the degree-1 tap
    permutations into the weights, and build 0/1 selection matrices for the rest."""
    KK = 2 ** k
    C_pad = _round_up(out_channels, 128)
    M = _monomial_transform(k)                                          # (KK, KK)
    A = (np.asarray(weight, np.float32) @ M.T).reshape(out_channels, P, KK)
    bias = A[:, :, 0].sum(axis=1)                                       # (C_out,)

    # degree-1: W1[q, c] = sum_j sum_{p: perm[j, p] == q} A[c, p, 1<<j]  (scatter-add)
    W1 = np.zeros((P, out_channels), np.float32)
    for j in range(k):
        np.add.at(W1, perm[j], A[:, :, 1 << j].T)

    # multi-element subsets (|S| >= 2): one (P, C_out) weight block each
    singleton_codes = {1 << j for j in range(k)}
    multi_codes = [s for s in range(1, KK) if s not in singleton_codes]
    multi_subsets = tuple(
        tuple(j for j in range(k) if (s >> j) & 1) for s in multi_codes)
    if multi_codes:
        Wm = np.stack([A[:, :, s].T for s in multi_codes], axis=0)      # (n_multi, P, C_out)
    else:
        Wm = np.zeros((1, P, out_channels), np.float32)                 # unused dummy

    # resident 0/1 selection matrices for the non-identity tap permutations:
    #   x_perm_j[n, p] = x[n, perm[j, p]] = (x @ S_j)[n, p],  S_j[perm[j, p], p] = 1
    perm_slot, s_list = [], []
    ident = np.arange(P)
    for j in range(k):
        if np.array_equal(perm[j], ident):
            perm_slot.append(-1)
        else:
            perm_slot.append(len(s_list))
            sj = np.zeros((P, P), np.float32)
            sj[perm[j], ident] = 1.0
            s_list.append(sj)
    if not s_list:
        s_list = [np.zeros((P, P), np.float32)]                         # unused dummy

    # lane-dense channel padding (weights are small and resident; X stays un-padded)
    W1p = np.zeros((P, C_pad), np.float32)
    W1p[:, :out_channels] = W1
    Wmp = np.zeros((Wm.shape[0], P, C_pad), np.float32)
    Wmp[:, :, :out_channels] = Wm
    bp = np.zeros((1, C_pad), np.float32)
    bp[0, :out_channels] = bias
    Smat = np.stack(s_list, axis=0)

    return (jnp.asarray(W1p, compute_dtype), jnp.asarray(Wmp, compute_dtype),
            jnp.asarray(Smat, compute_dtype), jnp.asarray(bp, jnp.float32),
            multi_subsets, tuple(perm_slot), C_pad)


def _choose_tile_n(n, p, c_pad, k, n_multi, n_s, x_bytes, out_bytes,
                   vmem_budget_bytes, min_grid_steps):
    """Largest tile_n whose working set (resident weights + double-buffered X/out blocks
    + in-kernel f32 temporaries) fits the VMEM budget, then shrunk so the single
    'parallel' grid axis has enough steps to shard across TensorCores (v7x megacore)."""
    # resident weight/bias blocks, conservatively counted double-buffered (constant
    # index_map; see TODO about pl.Buffered(1)).
    w_bytes = 2 * ((p * c_pad * (1 + n_multi) + n_s * p * p) * x_bytes + c_pad * 4)

    def live_bytes(tn):
        io = 2 * tn * p * x_bytes + 2 * tn * c_pad * out_bytes            # X + out, 2x buf
        tmp = (k + 1) * tn * p * 4 + tn * p * x_bytes + tn * c_pad * 4    # xp[j], mono, acc
        return w_bytes + io + tmp

    tile_n = 128
    for cand in (2048, 1024, 512, 256, 128):
        if live_bytes(cand) <= vmem_budget_bytes:
            tile_n = cand
            break
    tile_n = min(tile_n, max(128, _round_up(n, 128)))        # don't over-pad tiny N
    while tile_n > 256 and -(-n // tile_n) < min_grid_steps:  # keep >=min steps for 2 TCs
        tile_n //= 2
    return tile_n, live_bytes(tile_n)


def lut_conv_kernel(x_ref, s_ref, w1_ref, wm_ref, b_ref, o_ref, *, k, multi_subsets,
                    perm_slot, compute_dtype):
    """x_ref:  (TN, P)           compute_dtype  patch tile, streamed once (no k copies)
       s_ref:  (n_s, P, P)       compute_dtype  resident 0/1 tap-permutation matrices
       w1_ref: (P, Cp)           compute_dtype  degree-1 weights (all k tap perms folded)
       wm_ref: (n_multi, P, Cp)  compute_dtype  per-multi-subset monomial weights
       b_ref:  (1, Cp)           float32        constant (empty-subset) term
       o_ref:  (TN, Cp)          out dtype

    out[n, c] = bias[c] + (x @ W1)[n, c] + sum_{|S|>=2} (prod_{j in S} x_perm_j) @ W_S
    Permuted tap views are realized with exact 0/1 selection matmuls on the MXU; the
    monomial products are formed in f32 on the VPU and cast to compute_dtype only right
    before the MXU contraction (f32 accumulation everywhere).
    """
    x = x_ref[...]                                                     # (TN, P)
    acc = jnp.dot(x, w1_ref[...], preferred_element_type=jnp.float32) + b_ref[...]
    if multi_subsets:
        xp = []
        for j in range(k):                                             # static loop
            slot = perm_slot[j]
            if slot < 0:                                               # identity tap
                xp.append(x.astype(jnp.float32))
            else:
                xp.append(jnp.dot(x, s_ref[slot],
                                  preferred_element_type=jnp.float32))
        for idx, subset in enumerate(multi_subsets):                   # static loop
            mono = xp[subset[0]]
            for j in subset[1:]:
                mono = mono * xp[j]                                    # f32 VPU products
            acc = acc + jnp.dot(mono.astype(compute_dtype), wm_ref[idx],
                                preferred_element_type=jnp.float32)
    o_ref[...] = acc.astype(o_ref.dtype)


def lut_conv2d_forward(x, weight, mask, *, out_channels, kernel_size, stride=1,
                       padding=0, dilation=1, k=2, compute_dtype=jnp.bfloat16,
                       out_dtype=None, vmem_budget_bytes=32 * 1024 * 1024,
                       min_grid_steps=4, nhwc_output=False):
    """Forward pass.  vmem_budget_bytes default is sized for v7x (64 MiB/TC); raise to
    64-96 MiB on v5e/v6e.  out_dtype=None -> same as compute_dtype (bf16 output on the
    fast path); pass jnp.float32 for an f32 output."""
    kernel_size = _pair(kernel_size)
    stride, padding, dilation = _pair(stride), _pair(padding), _pair(dilation)
    KH, KW = kernel_size
    C_in = x.shape[1]
    P = C_in * KH * KW
    KK = 2 ** k
    out_dtype = compute_dtype if out_dtype is None else out_dtype
    assert weight.shape == (out_channels * P, KK), weight.shape

    # ---- host: per-tap patch-column permutations (de-dup tables over output channels)
    mask = np.asarray(mask)
    mask_flat = mask[:, 0] * (KH * KW) + mask[:, 1] * KW + mask[:, 2]       # (T*k,)
    sel = mask_flat.reshape(out_channels, P, k)
    if not np.all(sel == sel[:1]):
        # TODO(synk): a mask whose selections differ per output channel (random
        # MaskExpanded) needs a non-deduplicated path.
        raise ValueError("table input selections differ across output channels")
    perm = sel[0].T.astype(np.int64)                                        # (k, P)

    W1, Wm, Smat, bvec, multi_subsets, perm_slot, C_pad = _prepare_weights(
        weight, perm, out_channels, P, k, compute_dtype)

    # ---- unfold in compute dtype; X stays at true width P in HBM (no 128-padding) ----
    patches, (B, OH, OW, N) = _unfold(x.astype(compute_dtype), kernel_size, stride,
                                      padding, dilation)                    # (N, P)

    x_bytes = jnp.dtype(compute_dtype).itemsize
    out_bytes = jnp.dtype(out_dtype).itemsize
    tile_n, est_bytes = _choose_tile_n(N, P, C_pad, k, Wm.shape[0], Smat.shape[0],
                                       x_bytes, out_bytes, vmem_budget_bytes,
                                       min_grid_steps)
    N_pad = _round_up(N, tile_n)
    if N_pad != N:
        patches = jnp.pad(patches, ((0, N_pad - N), (0, 0)))
    vmem_limit = int(min(max(est_bytes + (8 << 20), 16 << 20), 112 << 20))

    kern = functools.partial(lut_conv_kernel, k=k, multi_subsets=multi_subsets,
                             perm_slot=perm_slot, compute_dtype=compute_dtype)
    out = pl.pallas_call(
        kern,
        out_shape=jax.ShapeDtypeStruct((N_pad, C_pad), out_dtype),
        grid=(N_pad // tile_n,),
        in_specs=[
            pl.BlockSpec((tile_n, P), lambda i: (i, 0)),          # X: streamed once
            pl.BlockSpec(Smat.shape, lambda i: (0, 0, 0)),        # resident perm mats
            pl.BlockSpec(W1.shape, lambda i: (0, 0)),             # resident deg-1 weights
            pl.BlockSpec(Wm.shape, lambda i: (0, 0, 0)),          # resident multi weights
            pl.BlockSpec((1, C_pad), lambda i: (0, 0)),           # resident bias
        ],
        out_specs=pl.BlockSpec((tile_n, C_pad), lambda i: (i, 0)),  # lane-dense stores
        compiler_params=pltpu.CompilerParams(
            dimension_semantics=("parallel",),
            vmem_limit_bytes=vmem_limit,
        ),
    )(patches, Smat, W1, Wm, bvec)

    out = out[:N, :out_channels].reshape(B, OH, OW, out_channels)
    if not nhwc_output:       # module semantics: NCHW (skip with nhwc_output=True)
        out = out.transpose(0, 3, 1, 2)
    return out


def ref_forward(x, weight, mask, *, out_channels, kernel_size, stride=1, padding=0,
                dilation=1, k=2):
    """Pure-JAX f32 reference of the module semantics (Lagrange form, no dedup)."""
    kernel_size = _pair(kernel_size)
    stride, padding, dilation = _pair(stride), _pair(padding), _pair(dilation)
    KH, KW = kernel_size
    patches, (B, OH, OW, N) = _unfold(x, kernel_size, stride, padding, dilation)
    patches = patches.astype(jnp.float32)
    P = patches.shape[1]
    T = out_channels * P
    KK = 2 ** k
    mask = np.asarray(mask)
    mask_flat = mask[:, 0] * (KH * KW) + mask[:, 1] * KW + mask[:, 2]   # (T*k,)
    idx = mask_flat.reshape(T, k)                                       # (T, k)
    Xr = patches[:, idx]                                                # (N, T, k)
    tt = jnp.asarray(_truth_table(k))                                   # (k, KK)
    phi = jnp.ones((N, T, KK), jnp.float32)
    for j in range(k):
        phi = phi * (1.0 + Xr[:, :, j, None] * tt[j][None, None, :]) * 0.5
    lut = jnp.sum(phi * jnp.asarray(weight, jnp.float32)[None], axis=-1)  # (N, T)
    out = lut.reshape(N, out_channels, P).sum(-1)                         # (N, C_out)
    return out.reshape(B, OH, OW, out_channels).transpose(0, 3, 1, 2)


if __name__ == "__main__":
    B, C_in, C_out, H, W = 2, 4, 4, 16, 16
    kernel_size, stride, padding, dilation, k = (3, 3), (1, 1), (1, 1), (1, 1), 2

    KH, KW = kernel_size
    T = C_out * C_in * KH * KW           # tables_count (MaskExpanded: one per selection)
    KK = 2 ** k

    key = jax.random.PRNGKey(0)
    kx, kw_ = jax.random.split(key)
    x = jax.random.normal(kx, (B, C_in, H, W), jnp.float32)
    # deterministic synthetic LUT weights (trainer weight: (tables_count, 2^k))
    weight = jax.random.normal(kw_, (T, KK), jnp.float32) * math.sqrt(1.0 / (C_in * KH * KW))

    mask = build_input_mask(C_in, C_out, KH, KW, k)   # (T*k, 3), the module's input_mask

    ref = jax.block_until_ready(ref_forward(
        x, weight, mask, out_channels=C_out, kernel_size=kernel_size,
        stride=stride, padding=padding, dilation=dilation, k=k))

    # f32 path: validates the dedup + permutation-fold + monomial-basis reformulation.
    out_f32 = jax.block_until_ready(lut_conv2d_forward(
        x, weight, mask, out_channels=C_out, kernel_size=kernel_size,
        stride=stride, padding=padding, dilation=dilation, k=k,
        compute_dtype=jnp.float32))
    assert out_f32.shape == (B, C_out, H, W), out_f32.shape
    np.testing.assert_allclose(np.asarray(out_f32, dtype=np.float32), np.asarray(ref),
                               rtol=5e-3, atol=5e-3)

    # bf16 path (default / fast): bf16 X + weight streams, f32 MXU accumulation,
    # f32 monomial products, bf16 output.
    out_bf16 = jax.block_until_ready(lut_conv2d_forward(
        x, weight, mask, out_channels=C_out, kernel_size=kernel_size,
        stride=stride, padding=padding, dilation=dilation, k=k))
    assert out_bf16.shape == (B, C_out, H, W), out_bf16.shape
    np.testing.assert_allclose(np.asarray(jnp.asarray(out_bf16, jnp.float32)),
                               np.asarray(ref), rtol=5e-2, atol=5e-2)

    print("KERNEL_OK")
</pallas_src>

<mosaic_0001>
module attributes {stable_mosaic.version = 11 : i64} {
  func.func @lut_conv_kernel(%arg0: i32, %arg1: memref<256x36xf32, #tpu.memory_space<vmem>>, %arg2: memref<1x36x36xf32, #tpu.memory_space<vmem>>, %arg3: memref<36x128xf32, #tpu.memory_space<vmem>>, %arg4: memref<1x36x128xf32, #tpu.memory_space<vmem>>, %arg5: memref<1x128xf32, #tpu.memory_space<vmem>>, %arg6: memref<256x128xf32, #tpu.memory_space<vmem>>) attributes {dimension_semantics = [#tpu.dimension_semantics<parallel>], iteration_bounds = array<i64: 2>, scalar_prefetch = 0 : i64, scratch_operands = 0 : i64, tpu.core_type = #tpu.core_type<tc>, window_params = [{transform_indices = @transform_0, window_bounds = array<i64: 256, 36>}, {pipeline_mode = #tpu.pipeline_mode<synchronous>, transform_indices = @transform_1, window_bounds = array<i64: 1, 36, 36>}, {pipeline_mode = #tpu.pipeline_mode<synchronous>, transform_indices = @transform_2, window_bounds = array<i64: 36, 128>}, {pipeline_mode = #tpu.pipeline_mode<synchronous>, transform_indices = @transform_3, window_bounds = array<i64: 1, 36, 128>}, {pipeline_mode = #tpu.pipeline_mode<synchronous>, transform_indices = @transform_4, window_bounds = array<i64: 1, 128>}, {transform_indices = @transform_5, window_bounds = array<i64: 256, 128>}]} {
    %c0 = arith.constant 0 : index
    %c0_0 = arith.constant 0 : index
    %0 = vector.load %arg1[%c0, %c0_0] : memref<256x36xf32, #tpu.memory_space<vmem>>, vector<256x36xf32>
    %c0_1 = arith.constant 0 : index
    %c0_2 = arith.constant 0 : index
    %1 = vector.load %arg3[%c0_1, %c0_2] : memref<36x128xf32, #tpu.memory_space<vmem>>, vector<36x128xf32>
    %cst = arith.constant dense<0.000000e+00> : vector<256x128xf32>
    %2 = tpu.matmul %0, %1, %cst {dimension_numbers = #tpu.dot_dimension_numbers<[1], [0], [0], [1], [0, 0, 1, 1], [], []>} : vector<256x36xf32>, vector<36x128xf32>, vector<256x128xf32> -> vector<256x128xf32>
    %c0_3 = arith.constant 0 : index
    %c0_4 = arith.constant 0 : index
    %3 = vector.load %arg5[%c0_3, %c0_4] : memref<1x128xf32, #tpu.memory_space<vmem>>, vector<1x128xf32>
    %4 = vector.broadcast %3 : vector<1x128xf32> to vector<256x128xf32>
    %5 = arith.addf %2, %4 : vector<256x128xf32>
    %c0_5 = arith.constant 0 : index
    %c0_6 = arith.constant 0 : index
    %c0_7 = arith.constant 0 : index
    %6 = vector.load %arg2[%c0_5, %c0_6, %c0_7] : memref<1x36x36xf32, #tpu.memory_space<vmem>>, vector<1x36x36xf32>
    %7 = vector.shape_cast %6 : vector<1x36x36xf32> to vector<36x36xf32>
    %cst_8 = arith.constant dense<0.000000e+00> : vector<256x36xf32>
    %8 = tpu.matmul %0, %7, %cst_8 {dimension_numbers = #tpu.dot_dimension_numbers<[1], [0], [0], [1], [0, 0, 1, 1], [], []>} : vector<256x36xf32>, vector<36x36xf32>, vector<256x36xf32> -> vector<256x36xf32>
    %9 = arith.mulf %0, %8 : vector<256x36xf32>
    %c0_9 = arith.constant 0 : index
    %c0_10 = arith.constant 0 : index
    %c0_11 = arith.constant 0 : index
    %10 = vector.load %arg4[%c0_9, %c0_10, %c0_11] : memref<1x36x128xf32, #tpu.memory_space<vmem>>, vector<1x36x128xf32>
    %11 = vector.shape_cast %10 : vector<1x36x128xf32> to vector<36x128xf32>
    %cst_12 = arith.constant dense<0.000000e+00> : vector<256x128xf32>
    %12 = tpu.matmul %9, %11, %cst_12 {dimension_numbers = #tpu.dot_dimension_numbers<[1], [0], [0], [1], [0, 0, 1, 1], [], []>} : vector<256x36xf32>, vector<36x128xf32>, vector<256x128xf32> -> vector<256x128xf32>
    %13 = arith.addf %5, %12 : vector<256x128xf32>
    %c0_13 = arith.constant 0 : index
    %c0_14 = arith.constant 0 : index
    %14 = vector.load %arg6[%c0_13, %c0_14] : memref<256x128xf32, #tpu.memory_space<vmem>>, vector<256x128xf32>
    tpu.vector_store %arg6[%c0_13, %c0_14], %13 {strides = array<i32>} : memref<256x128xf32, #tpu.memory_space<vmem>>, vector<256x128xf32>,
    return
  }
  func.func @transform_0(%arg0: i32) -> (i32, i32) {
    %c0_i32 = arith.constant 0 : i32
    %c0_i32_0 = arith.constant 0 : i32
    return %arg0, %c0_i32 : i32, i32
  }
  func.func @transform_1(%arg0: i32) -> (i32, i32, i32) {
    %c0_i32 = arith.constant 0 : i32
    %c0_i32_0 = arith.constant 0 : i32
    %c0_i32_1 = arith.constant 0 : i32
    %c0_i32_2 = arith.constant 0 : i32
    return %c0_i32, %c0_i32_0, %c0_i32_1 : i32, i32, i32
  }
  func.func @transform_2(%arg0: i32) -> (i32, i32) {
    %c0_i32 = arith.constant 0 : i32
    %c0_i32_0 = arith.constant 0 : i32
    %c0_i32_1 = arith.constant 0 : i32
    return %c0_i32, %c0_i32_0 : i32, i32
  }
  func.func @transform_3(%arg0: i32) -> (i32, i32, i32) {
    %c0_i32 = arith.constant 0 : i32
    %c0_i32_0 = arith.constant 0 : i32
    %c0_i32_1 = arith.constant 0 : i32
    %c0_i32_2 = arith.constant 0 : i32
    return %c0_i32, %c0_i32_0, %c0_i32_1 : i32, i32, i32
  }
  func.func @transform_4(%arg0: i32) -> (i32, i32) {
    %c0_i32 = arith.constant 0 : i32
    %c0_i32_0 = arith.constant 0 : i32
    %c0_i32_1 = arith.constant 0 : i32
    return %c0_i32, %c0_i32_0 : i32, i32
  }
  func.func @transform_5(%arg0: i32) -> (i32, i32) {
    %c0_i32 = arith.constant 0 : i32
    %c0_i32_0 = arith.constant 0 : i32
    return %arg0, %c0_i32 : i32, i32
  }
}

</mosaic_0001>

<llo_original>
// kernel: tpu_custom_call.1
$region0: #{tpu_custom_call.1}
  #allocation0 [shape = 'u32[]', space=smem, size = 0x4, offset = 0x4, fixed_abs, tag = 'smem constant byte address 0x4 - core index']
  #allocation1 [shape = 'u32[144,128]{1,0:T(1,128)}', space=vmem, size = 0x12000, scoped, tag = 'internal scratch']
  %s0 = inlined_call_operand.vmem [shape: f32[512,36], index: 0, kind: input, shape index: {}]
  %s1 = inlined_call_operand.vmem [shape: f32[1,36,36], index: 1, kind: input, shape index: {}]
  %s2 = inlined_call_operand.vmem [shape: f32[36,128], index: 2, kind: input, shape index: {}]
  %s3 = inlined_call_operand.vmem [shape: f32[1,36,128], index: 3, kind: input, shape index: {}]
  %s4 = inlined_call_operand.vmem [shape: f32[1,128], index: 4, kind: input, shape index: {}]
  %s5 = inlined_call_operand.hbm [shape: f32[512,128], index: 5, kind: output, shape index: {}]
  %s6 = sld [smem:[#allocation0]]
  $region53: #{tpu_custom_call.1} parent=0
    _
  %s8 = ssub.s32 1, %s6
  %s9 = scalar_select 0, %s8, %s6
  $region1: #{tpu_custom_call.1} parent=0
    #allocation2 [shape = 'u8[262144]{0}', space=vmem, size = 0x40000, scoped, tag = 'output window, operand 0']
    #allocation3 [shape = 's32[2]{0}', space=sflag, size = 0x8, scoped, tag = 'scoped memory for tpu_custom_call.1']
    %10 = vsyncpa [#allocation3], 0
    %s11 = scalar_lea.sflag [#allocation3], 1
    %12 = vsyncpa %s11, 0
    loop: start=0, step=1, limit=4
    $region2: #{tpu_custom_call.1} parent=1 // loop_pre_header
      _
    $region3: #{tpu_custom_call.1} parent=1 // loop_header
      %s14 = sphi 0, %s18
      %p15 = scmp.ge.s32.totalorder %s14, 4
      %s24 = sphi 0, %s26
      %s27 = sphi 0, %s24
      %s28 = sphi 0, %s27
      %s44 = sphi 0, %s28
      %s48 = sphi 0, %s48
      %s50 = sphi 0, %s48
      %s51 = sphi 0, %s50
      %s65 = sphi 0, %s51
      %s69 = sphi 0, %s69
      %s71 = sphi 0, %s69
      %s72 = sphi 0, %s71
      %s86 = sphi 0, %s72
      %s90 = sphi 0, %s90
      %s92 = sphi 0, %s90
      %s93 = sphi 0, %s92
      %s107 = sphi 0, %s93
      %s111 = sphi 0, %s111
      %s113 = sphi 0, %s111
      %s114 = sphi 0, %s113
      %s128 = sphi 0, %s114
      %s134 = sphi 0, %s136
      %s137 = sphi 0, %s134
      %s138 = sphi 0, %s137
      %s154 = sphi 0, %s138
    $region4: #{tpu_custom_call.1} parent=1 // loop_header_branch
      %17 = sbr.rel (%p15) target = $region8
    $region5: #{tpu_custom_call.1} parent=1 // loop_body
      %s19 = ssub.s32 %s14, 1
      %s20 = ssub.s32 %s14, 2
      %s21 = sadd.s32 %s14, 1
      %s22 = ssub.s32 %s14, %s21
      %p23 = scmp.eq.s32.totalorder %s22, 0
      %s25 = sadd.s32 %s24, 1
      %s26 = scalar_select %p23, %s24, %s25
      %p29 = pneg %p23
      %p30 = scmp.eq.s32.totalorder %s14, 1
      %p31 = por %p29, %p30
      %p32 = scmp.ne.s32.totalorder %s24, %s27
      %p33 = scmp.eq.s32.totalorder %s14, 0
      %p34 = por %p32, %p33
      %p35 = scmp.ne.s32.totalorder %s24, %s27
      %p36 = scmp.eq.s32.totalorder %s19, 1
      %p37 = por %p35, %p36
      %p38 = scmp.ne.s32.totalorder %s27, %s28
      %p39 = scmp.eq.s32.totalorder %s19, 0
      %p40 = por %p38, %p39
      %p41 = scmp.ne.s32.totalorder %s27, %s28
      %p42 = scmp.eq.s32.totalorder %s20, 1
      %p43 = por %p41, %p42
      %p45 = scmp.ne.s32.totalorder %s28, %s44
      %p46 = scmp.eq.s32.totalorder %s20, 0
      %p47 = por %p45, %p46
      %s49 = sadd.s32 %s48, 1
      %p52 = scmp.eq.s32.totalorder %s14, 1
      %p53 = scmp.ne.s32.totalorder %s48, %s50
      %p54 = scmp.eq.s32.totalorder %s14, 0
      %p55 = por %p53, %p54
      %p56 = scmp.ne.s32.totalorder %s48, %s50
      %p57 = scmp.eq.s32.totalorder %s19, 1
      %p58 = por %p56, %p57
      %p59 = scmp.ne.s32.totalorder %s50, %s51
      %p60 = scmp.eq.s32.totalorder %s19, 0
      %p61 = por %p59, %p60
      %p62 = scmp.ne.s32.totalorder %s50, %s51
      %p63 = scmp.eq.s32.totalorder %s20, 1
      %p64 = por %p62, %p63
      %p66 = scmp.ne.s32.totalorder %s51, %s65
      %p67 = scmp.eq.s32.totalorder %s20, 0
      %p68 = por %p66, %p67
      %s70 = sadd.s32 %s69, 1
      %p73 = scmp.eq.s32.totalorder %s14, 1
      %p74 = scmp.ne.s32.totalorder %s69, %s71
      %p75 = scmp.eq.s32.totalorder %s14, 0
      %p76 = por %p74, %p75
      %p77 = scmp.ne.s32.totalorder %s69, %s71
      %p78 = scmp.eq.s32.totalorder %s19, 1
      %p79 = por %p77, %p78
      %p80 = scmp.ne.s32.totalorder %s71, %s72
      %p81 = scmp.eq.s32.totalorder %s19, 0
      %p82 = por %p80, %p81
      %p83 = scmp.ne.s32.totalorder %s71, %s72
      %p84 = scmp.eq.s32.totalorder %s20, 1
      %p85 = por %p83, %p84
      %p87 = scmp.ne.s32.totalorder %s72, %s86
      %p88 = scmp.eq.s32.totalorder %s20, 0
      %p89 = por %p87, %p88
      %s91 = sadd.s32 %s90, 1
      %p94 = scmp.eq.s32.totalorder %s14, 1
      %p95 = scmp.ne.s32.totalorder %s90, %s92
      %p96 = scmp.eq.s32.totalorder %s14, 0
      %p97 = por %p95, %p96
      %p98 = scmp.ne.s32.totalorder %s90, %s92
      %p99 = scmp.eq.s32.totalorder %s19, 1
      %p100 = por %p98, %p99
      %p101 = scmp.ne.s32.totalorder %s92, %s93
      %p102 = scmp.eq.s32.totalorder %s19, 0
      %p103 = por %p101, %p102
      %p104 = scmp.ne.s32.totalorder %s92, %s93
      %p105 = scmp.eq.s32.totalorder %s20, 1
      %p106 = por %p104, %p105
      %p108 = scmp.ne.s32.totalorder %s93, %s107
      %p109 = scmp.eq.s32.totalorder %s20, 0
      %p110 = por %p108, %p109
      %s112 = sadd.s32 %s111, 1
      %p115 = scmp.eq.s32.totalorder %s14, 1
      %p116 = scmp.ne.s32.totalorder %s111, %s113
      %p117 = scmp.eq.s32.totalorder %s14, 0
      %p118 = por %p116, %p117
      %p119 = scmp.ne.s32.totalorder %s111, %s113
      %p120 = scmp.eq.s32.totalorder %s19, 1
      %p121 = por %p119, %p120
      %p122 = scmp.ne.s32.totalorder %s113, %s114
      %p123 = scmp.eq.s32.totalorder %s19, 0
      %p124 = por %p122, %p123
      %p125 = scmp.ne.s32.totalorder %s113, %s114
      %p126 = scmp.eq.s32.totalorder %s20, 1
      %p127 = por %p125, %p126
      %p129 = scmp.ne.s32.totalorder %s114, %s128
      %p130 = scmp.eq.s32.totalorder %s20, 0
      %p131 = por %p129, %p130
      %s132 = ssub.s32 %s14, %s21
      %p133 = scmp.eq.s32.totalorder %s132, 0
      %s135 = sadd.s32 %s134, 1
      %s136 = scalar_select %p133, %s134, %s135
      %p139 = pneg %p133
      %p140 = scmp.eq.s32.totalorder %s14, 1
      %p141 = por %p139, %p140
      %p142 = scmp.ne.s32.totalorder %s134, %s137
      %p143 = scmp.eq.s32.totalorder %s14, 0
      %p144 = por %p142, %p143
      %p145 = scmp.ne.s32.totalorder %s134, %s137
      %p146 = scmp.eq.s32.totalorder %s19, 1
      %p147 = por %p145, %p146
      %p148 = scmp.ne.s32.totalorder %s137, %s138
      %p149 = scmp.eq.s32.totalorder %s19, 0
      %p150 = por %p148, %p149
      %p151 = scmp.ne.s32.totalorder %s137, %s138
      %p152 = scmp.eq.s32.totalorder %s20, 1
      %p153 = por %p151, %p152
      %p155 = scmp.ne.s32.totalorder %s138, %s154
      %p156 = scmp.eq.s32.totalorder %s20, 0
      %p157 = por %p155, %p156
      %p158 = scmp.le.s32.totalorder 1, %s14
      %p159 = scmp.lt.s32.totalorder %s14, 3
      %p160 = pnand %p158, %p159
      %p161 = pneg %p160
      // Predicated region
      $region9: #{tpu_custom_call.1} parent=5 // pred_check
        _
      $region10: #{tpu_custom_call.1} parent=5 // pred_check_branch
        %163 = sbr.rel (%p160) target = $region12
      $region11: #{tpu_custom_call.1} parent=5 // pred_region
        %s164 = ssub.s32 %s14, 1
        // Predicated region
        $region13: #{tpu_custom_call.1} parent=11 // pred_check
          %p165 = pneg %p61
        $region14: #{tpu_custom_call.1} parent=11 // pred_check_branch
          %167 = sbr.rel (%p165) target = $region16
        $region15: #{tpu_custom_call.1} parent=11 // pred_region
          _
        $region16: #{tpu_custom_call.1} parent=11 // pred_fallthru
          _
        // Predicated region
        $region17: #{tpu_custom_call.1} parent=11 // pred_check
          %p168 = pneg %p82
        $region18: #{tpu_custom_call.1} parent=11 // pred_check_branch
          %170 = sbr.rel (%p168) target = $region20
        $region19: #{tpu_custom_call.1} parent=11 // pred_region
          _
        $region20: #{tpu_custom_call.1} parent=11 // pred_fallthru
          _
        // Predicated region
        $region21: #{tpu_custom_call.1} parent=11 // pred_check
          %p171 = pneg %p103
        $region22: #{tpu_custom_call.1} parent=11 // pred_check_branch
          %173 = sbr.rel (%p171) target = $region24
        $region23: #{tpu_custom_call.1} parent=11 // pred_region
          _
        $region24: #{tpu_custom_call.1} parent=11 // pred_fallthru
          _
        // Predicated region
        $region25: #{tpu_custom_call.1} parent=11 // pred_check
          %p174 = pneg %p124
        $region26: #{tpu_custom_call.1} parent=11 // pred_check_branch
          %176 = sbr.rel (%p174) target = $region28
        $region27: #{tpu_custom_call.1} parent=11 // pred_region
          _
        $region28: #{tpu_custom_call.1} parent=11 // pred_fallthru
          _
      $region12: #{tpu_custom_call.1} parent=5 // pred_fallthru
        _
      %p177 = scmp.lt.s32.totalorder %s14, 2
      // Predicated region
      $region29: #{tpu_custom_call.1} parent=5 // pred_check
        %p178 = pneg %p177
      $region30: #{tpu_custom_call.1} parent=5 // pred_check_branch
        %180 = sbr.rel (%p178) target = $region32
      $region31: #{tpu_custom_call.1} parent=5 // pred_region
        // Predicated region
        $region33: #{tpu_custom_call.1} parent=31 // pred_check
          %p181 = pneg %p34
        $region34: #{tpu_custom_call.1} parent=31 // pred_check_branch
          %183 = sbr.rel (%p181) target = $region36
        $region35: #{tpu_custom_call.1} parent=31 // pred_region
          %s184 = smul.u32 32, %s14
          %p185 = scmp.lt.s32.totalorder %s184, 63
          %s186 = scalar_select %p185, %s184, 63
          %s187 = smul.addr %s186, 8
          %s188 = scalar_lea.vmem %s0, %s187
          %s189 = smul.u32 32, %s14
        $region36: #{tpu_custom_call.1} parent=31 // pred_fallthru
          _
      $region32: #{tpu_custom_call.1} parent=5 // pred_fallthru
        _
      %p190 = scmp.le.s32.totalorder 1, %s14
      %p191 = scmp.lt.s32.totalorder %s14, 3
      %p192 = pnand %p190, %p191
      %p193 = pneg %p192
      // Predicated region
      $region37: #{tpu_custom_call.1} parent=5 // pred_check
        _
      $region38: #{tpu_custom_call.1} parent=5 // pred_check_branch
        %195 = sbr.rel (%p192) target = $region40
      $region39: #{tpu_custom_call.1} parent=5 // pred_region
        %s196 = ssub.s32 %s14, 1
        %s197 = smul.u32 32, %s19
        %p198 = scmp.lt.s32.totalorder %s197, 63
        %s199 = scalar_select %p198, %s197, 63
        %s200 = smul.addr %s199, 8
        %s201 = scalar_lea.vmem %s0, %s200
        %p202 = pneg %p40
        %p203 = pneg %p37
        %p204 = pneg %p61
        %p205 = pneg %p58
        %p206 = pneg %p82
        %p207 = pneg %p79
        %p208 = pneg %p103
        %p209 = pneg %p100
        %p210 = pneg %p124
        %p211 = pneg %p121
        %p212 = pneg %p150
        %p213 = pneg %p147
        %s214 = sand.u32 %s137, 1
        %s215 = scalar_lea.sflag [#allocation3], %s214
        %s216 = sand.u32 %s137, 1
        %s217 = smul.addr %s216, 256
        %s218 = scalar_lea.vmem [#allocation2], %s217
        %s219 = smul.u32 32, %s19
        %p220 = scmp.lt.s32.totalorder %s219, 63
        %s221 = scalar_select %p220, %s219, 63
        %s222 = smul.addr %s221, 8
        %s223 = scalar_lea.vmem %s0, %s222
        %s224 = smul.u32 32, %s19
        %s225 = smul.u32 32, %s19
        %v226 = vld [vmem:[%s223] sm:$0xff]
        %v227 = vld [vmem:[%s223 + $0x8] sm:$0xff]
        %v228 = vld [vmem:[%s223 + $0x10] sm:$0xff]
        %v229 = vld [vmem:[%s223 + $0x18] sm:$0xff]
        %v230 = vld [vmem:[%s223 + $0x20] sm:$0xff]
        %v231 = vld [vmem:[%s223 + $0x28] sm:$0xff]
        %v232 = vld [vmem:[%s223 + $0x30] sm:$0xff]
        %v233 = vld [vmem:[%s223 + $0x38] sm:$0xff]
        %v234 = vld [vmem:[%s223 + $0x40] sm:$0xff]
        %v235 = vld [vmem:[%s223 + $0x48] sm:$0xff]
        %v236 = vld [vmem:[%s223 + $0x50] sm:$0xff]
        %v237 = vld [vmem:[%s223 + $0x58] sm:$0xff]
        %v238 = vld [vmem:[%s223 + $0x60] sm:$0xff]
        %v239 = vld [vmem:[%s223 + $0x68] sm:$0xff]
        %v240 = vld [vmem:[%s223 + $0x70] sm:$0xff]
        %v241 = vld [vmem:[%s223 + $0x78] sm:$0xff]
        %v242 = vld [vmem:[%s223 + $0x80] sm:$0xff]
        %v243 = vld [vmem:[%s223 + $0x88] sm:$0xff]
        %v244 = vld [vmem:[%s223 + $0x90] sm:$0xff]
        %v245 = vld [vmem:[%s223 + $0x98] sm:$0xff]
        %v246 = vld [vmem:[%s223 + $0xa0] sm:$0xff]
        %v247 = vld [vmem:[%s223 + $0xa8] sm:$0xff]
        %v248 = vld [vmem:[%s223 + $0xb0] sm:$0xff]
        %v249 = vld [vmem:[%s223 + $0xb8] sm:$0xff]
        %v250 = vld [vmem:[%s223 + $0xc0] sm:$0xff]
        %v251 = vld [vmem:[%s223 + $0xc8] sm:$0xff]
        %v252 = vld [vmem:[%s223 + $0xd0] sm:$0xff]
        %v253 = vld [vmem:[%s223 + $0xd8] sm:$0xff]
        %v254 = vld [vmem:[%s223 + $0xe0] sm:$0xff]
        %v255 = vld [vmem:[%s223 + $0xe8] sm:$0xff]
        %v256 = vld [vmem:[%s223 + $0xf0] sm:$0xff]
        %v257 = vld [vmem:[%s223 + $0xf8] sm:$0xff]
        %v258 = vld [vmem:[%s2] sm:$0xff]
        %v259 = vld [vmem:[%s2 + $0x8] sm:$0xff]
        %v260 = vld [vmem:[%s2 + $0x10] sm:$0xff]
        %v261 = vld [vmem:[%s2 + $0x18] sm:$0xff]
        %v262 = vld [vmem:[%s2 + $0x20] sm:$0xf]
        %v263 = vld [vmem:[%s4] sm:$0x1]
        %v265 = vlaneseq
        %v266 = vshrl.u32 %v265, 7
        %v267 = vsub.s32 0, %v266
        %v268 = vrot.slane %v263, %v267
        %vm270 = vcmask 293888
        %v272 = vsel %vm270, %v226, 0
        %v275 = vsel %vm270, %v227, 0
        %v278 = vsel %vm270, %v228, 0
        %v281 = vsel %vm270, %v229, 0
        %v284 = vsel %vm270, %v230, 0
        %v287 = vsel %vm270, %v231, 0
        %v290 = vsel %vm270, %v232, 0
        %v293 = vsel %vm270, %v233, 0
        %v296 = vsel %vm270, %v234, 0
        %v299 = vsel %vm270, %v235, 0
        %v302 = vsel %vm270, %v236, 0
        %v305 = vsel %vm270, %v237, 0
        %v308 = vsel %vm270, %v238, 0
        %v311 = vsel %vm270, %v239, 0
        %v314 = vsel %vm270, %v240, 0
        %v317 = vsel %vm270, %v241, 0
        %v320 = vsel %vm270, %v242, 0
        %v323 = vsel %vm270, %v243, 0
        %v326 = vsel %vm270, %v244, 0
        %v329 = vsel %vm270, %v245, 0
        %v332 = vsel %vm270, %v246, 0
        %v335 = vsel %vm270, %v247, 0
        %v338 = vsel %vm270, %v248, 0
        %v341 = vsel %vm270, %v249, 0
        %v344 = vsel %vm270, %v250, 0
        %v347 = vsel %vm270, %v251, 0
        %v350 = vsel %vm270, %v252, 0
        %v353 = vsel %vm270, %v253, 0
        %v356 = vsel %vm270, %v254, 0
        %v359 = vsel %vm270, %v255, 0
        %v362 = vsel %vm270, %v256, 0
        %v365 = vsel %vm270, %v257, 0
        %vm367 = vcmask 1043456
        %v369 = vsel %vm367, %v262, 0
        %371 = vmatprep.subr.mxu0 0.0
        %372 = vmatpush1.msra.mxu0 0.0
        %373 = vmatprep.subr.mxu0 0.0
        %374 = vmatpush1.msra.mxu0 0.0
        %375 = vmatprep.subr.mxu0 0.0
        %376 = vmatpush1.msra.mxu0 0.0
        %377 = vmatprep.subr.mxu0 0.0
        %378 = vmatpush1.msra.mxu0 0.0
        %379 = vmatprep.subr.mxu0 0.0
        %380 = vmatpush1.msra.mxu0 0.0
        %381 = vmatprep.subr.mxu0 0.0
        %382 = vmatpush1.msra.mxu0 0.0
        %383 = vmatprep.subr.mxu0 0.0
        %384 = vmatpush1.msra.mxu0 0.0
        %385 = vmatprep.subr.mxu0 0.0
        %386 = vmatpush1.msra.mxu0 0.0
        %387 = vmatprep.subr.mxu0 0.0
        %388 = vmatpush1.msra.mxu0 0.0
        %389 = vmatprep.subr.mxu0 0.0
        %390 = vmatpush1.msra.mxu0 0.0
        %391 = vmatprep.subr.mxu0 0.0
        %392 = vmatpush1.msra.mxu0 0.0
        %393 = vmatprep.subr.mxu0 0.0
        %394 = vmatpush1.msra.mxu0 %v369
        %395 = vmatprep.subr.mxu0 0.0
        %396 = vmatpush1.msra.mxu0 %v261
        %397 = vmatprep.subr.mxu0 0.0
        %398 = vmatpush1.msra.mxu0 %v260
        %399 = vmatprep.subr.mxu0 0.0
        %400 = vmatpush1.msra.mxu0 %v259
        %401 = vmatprep.subr.mxu0 0.0
        %402 = vmatpush1.msra.mxu0 %v258
        %403 = vmatprep.subr.mxu0 0.0
        %404 = vmatpush2.msra.mxu0 0.0
        %405 = vmatprep.subr.mxu0 0.0
        %406 = vmatpush2.msra.mxu0 0.0
        %407 = vmatprep.subr.mxu0 0.0
        %408 = vmatpush2.msra.mxu0 0.0
        %409 = vmatprep.subr.mxu0 0.0
        %410 = vmatpush2.msra.mxu0 0.0
        %411 = vmatprep.subr.mxu0 0.0
        %412 = vmatpush2.msra.mxu0 0.0
        %413 = vmatprep.subr.mxu0 0.0
        %414 = vmatpush2.msra.mxu0 0.0
        %415 = vmatprep.subr.mxu0 0.0
        %416 = vmatpush2.msra.mxu0 0.0
        %417 = vmatprep.subr.mxu0 0.0
        %418 = vmatpush2.msra.mxu0 0.0
        %419 = vmatprep.subr.mxu0 0.0
        %420 = vmatpush2.msra.mxu0 0.0
        %421 = vmatprep.subr.mxu0 0.0
        %422 = vmatpush2.msra.mxu0 0.0
        %423 = vmatprep.subr.mxu0 0.0
        %424 = vmatpush2.msra.mxu0 0.0
        %425 = vmatprep.subr.mxu0 0.0
        %426 = vmatpush2.msra.mxu0 0.0
        %427 = vmatprep.subr.mxu0 0.0
        %428 = vmatpush2.msra.mxu0 0.0
        %429 = vmatprep.subr.mxu0 0.0
        %430 = vmatpush2.msra.mxu0 0.0
        %431 = vmatprep.subr.mxu0 0.0
        %432 = vmatpush2.msra.mxu0 0.0
        %433 = vmatprep.subr.mxu0 0.0
        %434 = vmatpush2.msra.mxu0 0.0
        %435 = vmatprep.mubr.f32.mxu0 0.0
        %436 = vmatmul.mubr.f32.gmra.mxu0 %v272
        %v437 = vpop.f32.mrf.mxu0
        %v438 = vadd.f32 %v268, %v437
        %v439 = vpop.f32.mrf.mxu0
        %440 = vmatprep.mubr.f32.mxu0 0.0
        %441 = vmatmul.mubr.f32.gmra.mxu0 %v275
        %v442 = vpop.f32.mrf.mxu0
        %v443 = vadd.f32 %v268, %v442
        %v444 = vpop.f32.mrf.mxu0
        %445 = vmatprep.mubr.f32.mxu0 0.0
        %446 = vmatmul.mubr.f32.gmra.mxu0 %v278
        %v447 = vpop.f32.mrf.mxu0
        %v448 = vadd.f32 %v268, %v447
        %v449 = vpop.f32.mrf.mxu0
        %450 = vmatprep.mubr.f32.mxu0 0.0
        %451 = vmatmul.mubr.f32.gmra.mxu0 %v281
        %v452 = vpop.f32.mrf.mxu0
        %v453 = vadd.f32 %v268, %v452
        %v454 = vpop.f32.mrf.mxu0
        %455 = vmatprep.mubr.f32.mxu0 0.0
        %456 = vmatmul.mubr.f32.gmra.mxu0 %v284
        %v457 = vpop.f32.mrf.mxu0
        %v458 = vadd.f32 %v268, %v457
        %v459 = vpop.f32.mrf.mxu0
        %460 = vmatprep.mubr.f32.mxu0 0.0
        %461 = vmatmul.mubr.f32.gmra.mxu0 %v287
        %v462 = vpop.f32.mrf.mxu0
        %v463 = vadd.f32 %v268, %v462
        %v464 = vpop.f32.mrf.mxu0
        %465 = vmatprep.mubr.f32.mxu0 0.0
        %466 = vmatmul.mubr.f32.gmra.mxu0 %v290
        %v467 = vpop.f32.mrf.mxu0
        %v468 = vadd.f32 %v268, %v467
        %v469 = vpop.f32.mrf.mxu0
        %470 = vmatprep.mubr.f32.mxu0 0.0
        %471 = vmatmul.mubr.f32.gmra.mxu0 %v293
        %v472 = vpop.f32.mrf.mxu0
        %v473 = vadd.f32 %v268, %v472
        %v474 = vpop.f32.mrf.mxu0
        %475 = vmatprep.mubr.f32.mxu0 0.0
        %476 = vmatmul.mubr.f32.gmra.mxu0 %v296
        %v477 = vpop.f32.mrf.mxu0
        %v478 = vadd.f32 %v268, %v477
        %v479 = vpop.f32.mrf.mxu0
        %480 = vmatprep.mubr.f32.mxu0 0.0
        %481 = vmatmul.mubr.f32.gmra.mxu0 %v299
        %v482 = vpop.f32.mrf.mxu0
        %v483 = vadd.f32 %v268, %v482
        %v484 = vpop.f32.mrf.mxu0
        %485 = vmatprep.mubr.f32.mxu0 0.0
        %486 = vmatmul.mubr.f32.gmra.mxu0 %v302
        %v487 = vpop.f32.mrf.mxu0
        %v488 = vadd.f32 %v268, %v487
        %v489 = vpop.f32.mrf.mxu0
        %490 = vmatprep.mubr.f32.mxu0 0.0
        %491 = vmatmul.mubr.f32.gmra.mxu0 %v305
        %v492 = vpop.f32.mrf.mxu0
        %v493 = vadd.f32 %v268, %v492
        %v494 = vpop.f32.mrf.mxu0
        %495 = vmatprep.mubr.f32.mxu0 0.0
        %496 = vmatmul.mubr.f32.gmra.mxu0 %v308
        %v497 = vpop.f32.mrf.mxu0
        %v498 = vadd.f32 %v268, %v497
        %v499 = vpop.f32.mrf.mxu0
        %500 = vmatprep.mubr.f32.mxu0 0.0
        %501 = vmatmul.mubr.f32.gmra.mxu0 %v311
        %v502 = vpop.f32.mrf.mxu0
        %v503 = vadd.f32 %v268, %v502
        %v504 = vpop.f32.mrf.mxu0
        %505 = vmatprep.mubr.f32.mxu0 0.0
        %506 = vmatmul.mubr.f32.gmra.mxu0 %v314
        %v507 = vpop.f32.mrf.mxu0
        %v508 = vadd.f32 %v268, %v507
        %v509 = vpop.f32.mrf.mxu0
        %510 = vmatprep.mubr.f32.mxu0 0.0
        %511 = vmatmul.mubr.f32.gmra.mxu0 %v317
        %v512 = vpop.f32.mrf.mxu0
        %v513 = vadd.f32 %v268, %v512
        %v514 = vpop.f32.mrf.mxu0
        %515 = vmatprep.mubr.f32.mxu0 0.0
        %516 = vmatmul.mubr.f32.gmra.mxu0 %v320
        %v517 = vpop.f32.mrf.mxu0
        %v518 = vadd.f32 %v268, %v517
        %v519 = vpop.f32.mrf.mxu0
        %520 = vmatprep.mubr.f32.mxu0 0.0
        %521 = vmatmul.mubr.f32.gmra.mxu0 %v323
        %v522 = vpop.f32.mrf.mxu0
        %v523 = vadd.f32 %v268, %v522
        %v524 = vpop.f32.mrf.mxu0
        %525 = vmatprep.mubr.f32.mxu0 0.0
        %526 = vmatmul.mubr.f32.gmra.mxu0 %v326
        %v527 = vpop.f32.mrf.mxu0
        %v528 = vadd.f32 %v268, %v527
        %v529 = vpop.f32.mrf.mxu0
        %530 = vmatprep.mubr.f32.mxu0 0.0
        %531 = vmatmul.mubr.f32.gmra.mxu0 %v329
        %v532 = vpop.f32.mrf.mxu0
        %v533 = vadd.f32 %v268, %v532
        %v534 = vpop.f32.mrf.mxu0
        %535 = vmatprep.mubr.f32.mxu0 0.0
        %536 = vmatmul.mubr.f32.gmra.mxu0 %v332
        %v537 = vpop.f32.mrf.mxu0
        %v538 = vadd.f32 %v268, %v537
        %v539 = vpop.f32.mrf.mxu0
        %540 = vmatprep.mubr.f32.mxu0 0.0
        %541 = vmatmul.mubr.f32.gmra.mxu0 %v335
        %v542 = vpop.f32.mrf.mxu0
        %v543 = vadd.f32 %v268, %v542
        %v544 = vpop.f32.mrf.mxu0
        %545 = vmatprep.mubr.f32.mxu0 0.0
        %546 = vmatmul.mubr.f32.gmra.mxu0 %v338
        %v547 = vpop.f32.mrf.mxu0
        %v548 = vadd.f32 %v268, %v547
        %v549 = vpop.f32.mrf.mxu0
        %550 = vmatprep.mubr.f32.mxu0 0.0
        %551 = vmatmul.mubr.f32.gmra.mxu0 %v341
        %v552 = vpop.f32.mrf.mxu0
        %v553 = vadd.f32 %v268, %v552
        %v554 = vpop.f32.mrf.mxu0
        %555 = vmatprep.mubr.f32.mxu0 0.0
        %556 = vmatmul.mubr.f32.gmra.mxu0 %v344
        %v557 = vpop.f32.mrf.mxu0
        %v558 = vadd.f32 %v268, %v557
        %v559 = vpop.f32.mrf.mxu0
        %560 = vmatprep.mubr.f32.mxu0 0.0
        %561 = vmatmul.mubr.f32.gmra.mxu0 %v347
        %v562 = vpop.f32.mrf.mxu0
        %v563 = vadd.f32 %v268, %v562
        %v564 = vpop.f32.mrf.mxu0
        %565 = vmatprep.mubr.f32.mxu0 0.0
        %566 = vmatmul.mubr.f32.gmra.mxu0 %v350
        %v567 = vpop.f32.mrf.mxu0
        %v568 = vadd.f32 %v268, %v567
        %v569 = vpop.f32.mrf.mxu0
        %570 = vmatprep.mubr.f32.mxu0 0.0
        %571 = vmatmul.mubr.f32.gmra.mxu0 %v353
        %v572 = vpop.f32.mrf.mxu0
        %v573 = vadd.f32 %v268, %v572
        %v574 = vpop.f32.mrf.mxu0
        %575 = vmatprep.mubr.f32.mxu0 0.0
        %576 = vmatmul.mubr.f32.gmra.mxu0 %v356
        %v577 = vpop.f32.mrf.mxu0
        %v578 = vadd.f32 %v268, %v577
        %v579 = vpop.f32.mrf.mxu0
        %580 = vmatprep.mubr.f32.mxu0 0.0
        %581 = vmatmul.mubr.f32.gmra.mxu0 %v359
        %v582 = vpop.f32.mrf.mxu0
        %v583 = vadd.f32 %v268, %v582
        %v584 = vpop.f32.mrf.mxu0
        %585 = vmatprep.mubr.f32.mxu0 0.0
        %586 = vmatmul.mubr.f32.gmra.mxu0 %v362
        %v587 = vpop.f32.mrf.mxu0
        %v588 = vadd.f32 %v268, %v587
        %v589 = vpop.f32.mrf.mxu0
        %590 = vmatprep.mubr.f32.mxu0 0.0
        %591 = vmatmul.mubr.f32.gmra.mxu0 %v365
        %v592 = vpop.f32.mrf.mxu0
        %v593 = vadd.f32 %v268, %v592
        %v594 = vpop.f32.mrf.mxu0
        %595 = vdwg.mxu0
        %v596 = vld [vmem:[%s1] sm:$0xff]
        %v597 = vld [vmem:[%s1 + $0x8] sm:$0xff]
        %v598 = vld [vmem:[%s1 + $0x10] sm:$0xff]
        %v599 = vld [vmem:[%s1 + $0x18] sm:$0xff]
        %v600 = vld [vmem:[%s1 + $0x20] sm:$0xf]
        %v602 = vsel %vm367, %v600, 0
        %604 = vmatprep.subr.mxu0 0.0
        %605 = vmatpush1.msra.mxu0 0.0
        %606 = vmatprep.subr.mxu0 0.0
        %607 = vmatpush1.msra.mxu0 0.0
        %608 = vmatprep.subr.mxu0 0.0
        %609 = vmatpush1.msra.mxu0 0.0
        %610 = vmatprep.subr.mxu0 0.0
        %611 = vmatpush1.msra.mxu0 0.0
        %612 = vmatprep.subr.mxu0 0.0
        %613 = vmatpush1.msra.mxu0 0.0
        %614 = vmatprep.subr.mxu0 0.0
        %615 = vmatpush1.msra.mxu0 0.0
        %616 = vmatprep.subr.mxu0 0.0
        %617 = vmatpush1.msra.mxu0 0.0
        %618 = vmatprep.subr.mxu0 0.0
        %619 = vmatpush1.msra.mxu0 0.0
        %620 = vmatprep.subr.mxu0 0.0
        %621 = vmatpush1.msra.mxu0 0.0
        %622 = vmatprep.subr.mxu0 0.0
        %623 = vmatpush1.msra.mxu0 0.0
        %624 = vmatprep.subr.mxu0 0.0
        %625 = vmatpush1.msra.mxu0 0.0
        %626 = vmatprep.subr.mxu0 0.0
        %627 = vmatpush1.msra.mxu0 %v602
        %628 = vmatprep.subr.mxu0 0.0
        %629 = vmatpush1.msra.mxu0 %v599
        %630 = vmatprep.subr.mxu0 0.0
        %631 = vmatpush1.msra.mxu0 %v598
        %632 = vmatprep.subr.mxu0 0.0
        %633 = vmatpush1.msra.mxu0 %v597
        %634 = vmatprep.subr.mxu0 0.0
        %635 = vmatpush1.msra.mxu0 %v596
        %636 = vmatprep.subr.mxu0 0.0
        %637 = vmatpush2.msra.mxu0 0.0
        %638 = vmatprep.subr.mxu0 0.0
        %639 = vmatpush2.msra.mxu0 0.0
        %640 = vmatprep.subr.mxu0 0.0
        %641 = vmatpush2.msra.mxu0 0.0
        %642 = vmatprep.subr.mxu0 0.0
        %643 = vmatpush2.msra.mxu0 0.0
        %644 = vmatprep.subr.mxu0 0.0
        %645 = vmatpush2.msra.mxu0 0.0
        %646 = vmatprep.subr.mxu0 0.0
        %647 = vmatpush2.msra.mxu0 0.0
        %648 = vmatprep.subr.mxu0 0.0
        %649 = vmatpush2.msra.mxu0 0.0
        %650 = vmatprep.subr.mxu0 0.0
        %651 = vmatpush2.msra.mxu0 0.0
        %652 = vmatprep.subr.mxu0 0.0
        %653 = vmatpush2.msra.mxu0 0.0
        %654 = vmatprep.subr.mxu0 0.0
        %655 = vmatpush2.msra.mxu0 0.0
        %656 = vmatprep.subr.mxu0 0.0
        %657 = vmatpush2.msra.mxu0 0.0
        %658 = vmatprep.subr.mxu0 0.0
        %659 = vmatpush2.msra.mxu0 0.0
        %660 = vmatprep.subr.mxu0 0.0
        %661 = vmatpush2.msra.mxu0 0.0
        %662 = vmatprep.subr.mxu0 0.0
        %663 = vmatpush2.msra.mxu0 0.0
        %664 = vmatprep.subr.mxu0 0.0
        %665 = vmatpush2.msra.mxu0 0.0
        %666 = vmatprep.subr.mxu0 0.0
        %667 = vmatpush2.msra.mxu0 0.0
        %668 = vmatprep.mubr.f32.mxu0 0.0
        %669 = vmatmul.mubr.f32.gmra.mxu0 %v272
        %v670 = vpop.f32.mrf.mxu0
        %v671 = vadd.f32 0.0, %v670
        %v672 = vpop.f32.mrf.mxu0
        %673 = vmatprep.mubr.f32.mxu0 0.0
        %674 = vmatmul.mubr.f32.gmra.mxu0 %v275
        %v675 = vpop.f32.mrf.mxu0
        %v676 = vadd.f32 0.0, %v675
        %v677 = vpop.f32.mrf.mxu0
        %678 = vmatprep.mubr.f32.mxu0 0.0
        %679 = vmatmul.mubr.f32.gmra.mxu0 %v278
        %v680 = vpop.f32.mrf.mxu0
        %v681 = vadd.f32 0.0, %v680
        %v682 = vpop.f32.mrf.mxu0
        %683 = vmatprep.mubr.f32.mxu0 0.0
        %684 = vmatmul.mubr.f32.gmra.mxu0 %v281
        %v685 = vpop.f32.mrf.mxu0
        %v686 = vadd.f32 0.0, %v685
        %v687 = vpop.f32.mrf.mxu0
        %688 = vmatprep.mubr.f32.mxu0 0.0
        %689 = vmatmul.mubr.f32.gmra.mxu0 %v284
        %v690 = vpop.f32.mrf.mxu0
        %v691 = vadd.f32 0.0, %v690
        %v692 = vpop.f32.mrf.mxu0
        %693 = vmatprep.mubr.f32.mxu0 0.0
        %694 = vmatmul.mubr.f32.gmra.mxu0 %v287
        %v695 = vpop.f32.mrf.mxu0
        %v696 = vadd.f32 0.0, %v695
        %v697 = vpop.f32.mrf.mxu0
        %698 = vmatprep.mubr.f32.mxu0 0.0
        %699 = vmatmul.mubr.f32.gmra.mxu0 %v290
        %v700 = vpop.f32.mrf.mxu0
        %v701 = vadd.f32 0.0, %v700
        %v702 = vpop.f32.mrf.mxu0
        %703 = vmatprep.mubr.f32.mxu0 0.0
        %704 = vmatmul.mubr.f32.gmra.mxu0 %v293
        %v705 = vpop.f32.mrf.mxu0
        %v706 = vadd.f32 0.0, %v705
        %v707 = vpop.f32.mrf.mxu0
        %708 = vmatprep.mubr.f32.mxu0 0.0
        %709 = vmatmul.mubr.f32.gmra.mxu0 %v296
        %v710 = vpop.f32.mrf.mxu0
        %v711 = vadd.f32 0.0, %v710
        %v712 = vpop.f32.mrf.mxu0
        %713 = vmatprep.mubr.f32.mxu0 0.0
        %714 = vmatmul.mubr.f32.gmra.mxu0 %v299
        %v715 = vpop.f32.mrf.mxu0
        %v716 = vadd.f32 0.0, %v715
        %v717 = vpop.f32.mrf.mxu0
        %718 = vmatprep.mubr.f32.mxu0 0.0
        %719 = vmatmul.mubr.f32.gmra.mxu0 %v302
        %v720 = vpop.f32.mrf.mxu0
        %v721 = vadd.f32 0.0, %v720
        %v722 = vpop.f32.mrf.mxu0
        %723 = vmatprep.mubr.f32.mxu0 0.0
        %724 = vmatmul.mubr.f32.gmra.mxu0 %v305
        %v725 = vpop.f32.mrf.mxu0
        %v726 = vadd.f32 0.0, %v725
        %v727 = vpop.f32.mrf.mxu0
        %728 = vmatprep.mubr.f32.mxu0 0.0
        %729 = vmatmul.mubr.f32.gmra.mxu0 %v308
        %v730 = vpop.f32.mrf.mxu0
        %v731 = vadd.f32 0.0, %v730
        %v732 = vpop.f32.mrf.mxu0
        %733 = vmatprep.mubr.f32.mxu0 0.0
        %734 = vmatmul.mubr.f32.gmra.mxu0 %v311
        %v735 = vpop.f32.mrf.mxu0
        %v736 = vadd.f32 0.0, %v735
        %v737 = vpop.f32.mrf.mxu0
        %738 = vmatprep.mubr.f32.mxu0 0.0
        %739 = vmatmul.mubr.f32.gmra.mxu0 %v314
        %v740 = vpop.f32.mrf.mxu0
        %v741 = vadd.f32 0.0, %v740
        %v742 = vpop.f32.mrf.mxu0
        %743 = vmatprep.mubr.f32.mxu0 0.0
        %744 = vmatmul.mubr.f32.gmra.mxu0 %v317
        %v745 = vpop.f32.mrf.mxu0
        %v746 = vadd.f32 0.0, %v745
        %v747 = vpop.f32.mrf.mxu0
        %748 = vmatprep.mubr.f32.mxu0 0.0
        %749 = vmatmul.mubr.f32.gmra.mxu0 %v320
        %v750 = vpop.f32.mrf.mxu0
        %v751 = vadd.f32 0.0, %v750
        %v752 = vpop.f32.mrf.mxu0
        %753 = vmatprep.mubr.f32.mxu0 0.0
        %754 = vmatmul.mubr.f32.gmra.mxu0 %v323
        %v755 = vpop.f32.mrf.mxu0
        %v756 = vadd.f32 0.0, %v755
        %v757 = vpop.f32.mrf.mxu0
        %758 = vmatprep.mubr.f32.mxu0 0.0
        %759 = vmatmul.mubr.f32.gmra.mxu0 %v326
        %v760 = vpop.f32.mrf.mxu0
        %v761 = vadd.f32 0.0, %v760
        %v762 = vpop.f32.mrf.mxu0
        %763 = vmatprep.mubr.f32.mxu0 0.0
        %764 = vmatmul.mubr.f32.gmra.mxu0 %v329
        %v765 = vpop.f32.mrf.mxu0
        %v766 = vadd.f32 0.0, %v765
        %v767 = vpop.f32.mrf.mxu0
        %768 = vmatprep.mubr.f32.mxu0 0.0
        %769 = vmatmul.mubr.f32.gmra.mxu0 %v332
        %v770 = vpop.f32.mrf.mxu0
        %v771 = vadd.f32 0.0, %v770
        %v772 = vpop.f32.mrf.mxu0
        %773 = vmatprep.mubr.f32.mxu0 0.0
        %774 = vmatmul.mubr.f32.gmra.mxu0 %v335
        %v775 = vpop.f32.mrf.mxu0
        %v776 = vadd.f32 0.0, %v775
        %v777 = vpop.f32.mrf.mxu0
        %778 = vmatprep.mubr.f32.mxu0 0.0
        %779 = vmatmul.mubr.f32.gmra.mxu0 %v338
        %v780 = vpop.f32.mrf.mxu0
        %v781 = vadd.f32 0.0, %v780
        %v782 = vpop.f32.mrf.mxu0
        %783 = vmatprep.mubr.f32.mxu0 0.0
        %784 = vmatmul.mubr.f32.gmra.mxu0 %v341
        %v785 = vpop.f32.mrf.mxu0
        %v786 = vadd.f32 0.0, %v785
        %v787 = vpop.f32.mrf.mxu0
        %788 = vmatprep.mubr.f32.mxu0 0.0
        %789 = vmatmul.mubr.f32.gmra.mxu0 %v344
        %v790 = vpop.f32.mrf.mxu0
        %v791 = vadd.f32 0.0, %v790
        %v792 = vpop.f32.mrf.mxu0
        %793 = vmatprep.mubr.f32.mxu0 0.0
        %794 = vmatmul.mubr.f32.gmra.mxu0 %v347
        %v795 = vpop.f32.mrf.mxu0
        %v796 = vadd.f32 0.0, %v795
        %v797 = vpop.f32.mrf.mxu0
        %798 = vmatprep.mubr.f32.mxu0 0.0
        %799 = vmatmul.mubr.f32.gmra.mxu0 %v350
        %v800 = vpop.f32.mrf.mxu0
        %v801 = vadd.f32 0.0, %v800
        %v802 = vpop.f32.mrf.mxu0
        %803 = vmatprep.mubr.f32.mxu0 0.0
        %804 = vmatmul.mubr.f32.gmra.mxu0 %v353
        %v805 = vpop.f32.mrf.mxu0
        %v806 = vadd.f32 0.0, %v805
        %v807 = vpop.f32.mrf.mxu0
        %808 = vmatprep.mubr.f32.mxu0 0.0
        %809 = vmatmul.mubr.f32.gmra.mxu0 %v356
        %v810 = vpop.f32.mrf.mxu0
        %v811 = vadd.f32 0.0, %v810
        %v812 = vpop.f32.mrf.mxu0
        %813 = vmatprep.mubr.f32.mxu0 0.0
        %814 = vmatmul.mubr.f32.gmra.mxu0 %v359
        %v815 = vpop.f32.mrf.mxu0
        %v816 = vadd.f32 0.0, %v815
        %v817 = vpop.f32.mrf.mxu0
        %818 = vmatprep.mubr.f32.mxu0 0.0
        %819 = vmatmul.mubr.f32.gmra.mxu0 %v362
        %v820 = vpop.f32.mrf.mxu0
        %v821 = vadd.f32 0.0, %v820
        %v822 = vpop.f32.mrf.mxu0
        %823 = vmatprep.mubr.f32.mxu0 0.0
        %824 = vmatmul.mubr.f32.gmra.mxu0 %v365
        %v825 = vpop.f32.mrf.mxu0
        %v826 = vadd.f32 0.0, %v825
        %v827 = vpop.f32.mrf.mxu0
        %828 = vdwg.mxu0
        %v829 = vmul.f32 %v226, %v671
        %v830 = vmul.f32 %v227, %v676
        %v831 = vmul.f32 %v228, %v681
        %v832 = vmul.f32 %v229, %v686
        %v833 = vmul.f32 %v230, %v691
        %v834 = vmul.f32 %v231, %v696
        %v835 = vmul.f32 %v232, %v701
        %v836 = vmul.f32 %v233, %v706
        %v837 = vmul.f32 %v234, %v711
        %v838 = vmul.f32 %v235, %v716
        %v839 = vmul.f32 %v236, %v721
        %v840 = vmul.f32 %v237, %v726
        %v841 = vmul.f32 %v238, %v731
        %v842 = vmul.f32 %v239, %v736
        %v843 = vmul.f32 %v240, %v741
        %v844 = vmul.f32 %v241, %v746
        %v845 = vmul.f32 %v242, %v751
        %v846 = vmul.f32 %v243, %v756
        %v847 = vmul.f32 %v244, %v761
        %v848 = vmul.f32 %v245, %v766
        %v849 = vmul.f32 %v246, %v771
        %v850 = vmul.f32 %v247, %v776
        %v851 = vmul.f32 %v248, %v781
        %v852 = vmul.f32 %v249, %v786
        %v853 = vmul.f32 %v250, %v791
        %v854 = vmul.f32 %v251, %v796
        %v855 = vmul.f32 %v252, %v801
        %v856 = vmul.f32 %v253, %v806
        %v857 = vmul.f32 %v254, %v811
        %v858 = vmul.f32 %v255, %v816
        %v859 = vmul.f32 %v256, %v821
        %v860 = vmul.f32 %v257, %v826
        %v861 = vld [vmem:[%s3] sm:$0xff]
        %v862 = vld [vmem:[%s3 + $0x8] sm:$0xff]
        %v863 = vld [vmem:[%s3 + $0x10] sm:$0xff]
        %v864 = vld [vmem:[%s3 + $0x18] sm:$0xff]
        %v865 = vld [vmem:[%s3 + $0x20] sm:$0xf]
        %v867 = vsel %vm270, %v829, 0
        %v870 = vsel %vm270, %v830, 0
        %v873 = vsel %vm270, %v831, 0
        %v876 = vsel %vm270, %v832, 0
        %v879 = vsel %vm270, %v833, 0
        %v882 = vsel %vm270, %v834, 0
        %v885 = vsel %vm270, %v835, 0
        %v888 = vsel %vm270, %v836, 0
        %v891 = vsel %vm270, %v837, 0
        %v894 = vsel %vm270, %v838, 0
        %v897 = vsel %vm270, %v839, 0
        %v900 = vsel %vm270, %v840, 0
        %v903 = vsel %vm270, %v841, 0
        %v906 = vsel %vm270, %v842, 0
        %v909 = vsel %vm270, %v843, 0
        %v912 = vsel %vm270, %v844, 0
        %v915 = vsel %vm270, %v845, 0
        %v918 = vsel %vm270, %v846, 0
        %v921 = vsel %vm270, %v847, 0
        %v924 = vsel %vm270, %v848, 0
        %v927 = vsel %vm270, %v849, 0
        %v930 = vsel %vm270, %v850, 0
        %v933 = vsel %vm270, %v851, 0
        %v936 = vsel %vm270, %v852, 0
        %v939 = vsel %vm270, %v853, 0
        %v942 = vsel %vm270, %v854, 0
        %v945 = vsel %vm270, %v855, 0
        %v948 = vsel %vm270, %v856, 0
        %v951 = vsel %vm270, %v857, 0
        %v954 = vsel %vm270, %v858, 0
        %v957 = vsel %vm270, %v859, 0
        %v960 = vsel %vm270, %v860, 0
        %v963 = vsel %vm367, %v865, 0
        %965 = vmatprep.subr.mxu0 0.0
        %966 = vmatpush1.msra.mxu0 0.0
        %967 = vmatprep.subr.mxu0 0.0
        %968 = vmatpush1.msra.mxu0 0.0
        %969 = vmatprep.subr.mxu0 0.0
        %970 = vmatpush1.msra.mxu0 0.0
        %971 = vmatprep.subr.mxu0 0.0
        %972 = vmatpush1.msra.mxu0 0.0
        %973 = vmatprep.subr.mxu0 0.0
        %974 = vmatpush1.msra.mxu0 0.0
        %975 = vmatprep.subr.mxu0 0.0
        %976 = vmatpush1.msra.mxu0 0.0
        %977 = vmatprep.subr.mxu0 0.0
        %978 = vmatpush1.msra.mxu0 0.0
        %979 = vmatprep.subr.mxu0 0.0
        %980 = vmatpush1.msra.mxu0 0.0
        %981 = vmatprep.subr.mxu0 0.0
        %982 = vmatpush1.msra.mxu0 0.0
        %983 = vmatprep.subr.mxu0 0.0
        %984 = vmatpush1.msra.mxu0 0.0
        %985 = vmatprep.subr.mxu0 0.0
        %986 = vmatpush1.msra.mxu0 0.0
        %987 = vmatprep.subr.mxu0 0.0
        %988 = vmatpush1.msra.mxu0 %v963
        %989 = vmatprep.subr.mxu0 0.0
        %990 = vmatpush1.msra.mxu0 %v864
        %991 = vmatprep.subr.mxu0 0.0
        %992 = vmatpush1.msra.mxu0 %v863
        %993 = vmatprep.subr.mxu0 0.0
        %994 = vmatpush1.msra.mxu0 %v862
        %995 = vmatprep.subr.mxu0 0.0
        %996 = vmatpush1.msra.mxu0 %v861
        %997 = vmatprep.subr.mxu0 0.0
        %998 = vmatpush2.msra.mxu0 0.0
        %999 = vmatprep.subr.mxu0 0.0
        %1000 = vmatpush2.msra.mxu0 0.0
        %1001 = vmatprep.subr.mxu0 0.0
        %1002 = vmatpush2.msra.mxu0 0.0
        %1003 = vmatprep.subr.mxu0 0.0
        %1004 = vmatpush2.msra.mxu0 0.0
        %1005 = vmatprep.subr.mxu0 0.0
        %1006 = vmatpush2.msra.mxu0 0.0
        %1007 = vmatprep.subr.mxu0 0.0
        %1008 = vmatpush2.msra.mxu0 0.0
        %1009 = vmatprep.subr.mxu0 0.0
        %1010 = vmatpush2.msra.mxu0 0.0
        %1011 = vmatprep.subr.mxu0 0.0
        %1012 = vmatpush2.msra.mxu0 0.0
        %1013 = vmatprep.subr.mxu0 0.0
        %1014 = vmatpush2.msra.mxu0 0.0
        %1015 = vmatprep.subr.mxu0 0.0
        %1016 = vmatpush2.msra.mxu0 0.0
        %1017 = vmatprep.subr.mxu0 0.0
        %1018 = vmatpush2.msra.mxu0 0.0
        %1019 = vmatprep.subr.mxu0 0.0
        %1020 = vmatpush2.msra.mxu0 0.0
        %1021 = vmatprep.subr.mxu0 0.0
        %1022 = vmatpush2.msra.mxu0 0.0
        %1023 = vmatprep.subr.mxu0 0.0
        %1024 = vmatpush2.msra.mxu0 0.0
        %1025 = vmatprep.subr.mxu0 0.0
        %1026 = vmatpush2.msra.mxu0 0.0
        %1027 = vmatprep.subr.mxu0 0.0
        %1028 = vmatpush2.msra.mxu0 0.0
        %1029 = vmatprep.mubr.f32.mxu0 0.0
        %1030 = vmatmul.mubr.f32.gmra.mxu0 %v867
        %v1031 = vpop.f32.mrf.mxu0
        %v1032 = vadd.f32 0.0, %v1031
        %v1033 = vpop.f32.mrf.mxu0
        %1034 = vmatprep.mubr.f32.mxu0 0.0
        %1035 = vmatmul.mubr.f32.gmra.mxu0 %v870
        %v1036 = vpop.f32.mrf.mxu0
        %v1037 = vadd.f32 0.0, %v1036
        %v1038 = vpop.f32.mrf.mxu0
        %1039 = vmatprep.mubr.f32.mxu0 0.0
        %1040 = vmatmul.mubr.f32.gmra.mxu0 %v873
        %v1041 = vpop.f32.mrf.mxu0
        %v1042 = vadd.f32 0.0, %v1041
        %v1043 = vpop.f32.mrf.mxu0
        %1044 = vmatprep.mubr.f32.mxu0 0.0
        %1045 = vmatmul.mubr.f32.gmra.mxu0 %v876
        %v1046 = vpop.f32.mrf.mxu0
        %v1047 = vadd.f32 0.0, %v1046
        %v1048 = vpop.f32.mrf.mxu0
        %1049 = vmatprep.mubr.f32.mxu0 0.0
        %1050 = vmatmul.mubr.f32.gmra.mxu0 %v879
        %v1051 = vpop.f32.mrf.mxu0
        %v1052 = vadd.f32 0.0, %v1051
        %v1053 = vpop.f32.mrf.mxu0
        %1054 = vmatprep.mubr.f32.mxu0 0.0
        %1055 = vmatmul.mubr.f32.gmra.mxu0 %v882
        %v1056 = vpop.f32.mrf.mxu0
        %v1057 = vadd.f32 0.0, %v1056
        %v1058 = vpop.f32.mrf.mxu0
        %1059 = vmatprep.mubr.f32.mxu0 0.0
        %1060 = vmatmul.mubr.f32.gmra.mxu0 %v885
        %v1061 = vpop.f32.mrf.mxu0
        %v1062 = vadd.f32 0.0, %v1061
        %v1063 = vpop.f32.mrf.mxu0
        %1064 = vmatprep.mubr.f32.mxu0 0.0
        %1065 = vmatmul.mubr.f32.gmra.mxu0 %v888
        %v1066 = vpop.f32.mrf.mxu0
        %v1067 = vadd.f32 0.0, %v1066
        %v1068 = vpop.f32.mrf.mxu0
        %1069 = vmatprep.mubr.f32.mxu0 0.0
        %1070 = vmatmul.mubr.f32.gmra.mxu0 %v891
        %v1071 = vpop.f32.mrf.mxu0
        %v1072 = vadd.f32 0.0, %v1071
        %v1073 = vpop.f32.mrf.mxu0
        %1074 = vmatprep.mubr.f32.mxu0 0.0
        %1075 = vmatmul.mubr.f32.gmra.mxu0 %v894
        %v1076 = vpop.f32.mrf.mxu0
        %v1077 = vadd.f32 0.0, %v1076
        %v1078 = vpop.f32.mrf.mxu0
        %1079 = vmatprep.mubr.f32.mxu0 0.0
        %1080 = vmatmul.mubr.f32.gmra.mxu0 %v897
        %v1081 = vpop.f32.mrf.mxu0
        %v1082 = vadd.f32 0.0, %v1081
        %v1083 = vpop.f32.mrf.mxu0
        %1084 = vmatprep.mubr.f32.mxu0 0.0
        %1085 = vmatmul.mubr.f32.gmra.mxu0 %v900
        %v1086 = vpop.f32.mrf.mxu0
        %v1087 = vadd.f32 0.0, %v1086
        %v1088 = vpop.f32.mrf.mxu0
        %1089 = vmatprep.mubr.f32.mxu0 0.0
        %1090 = vmatmul.mubr.f32.gmra.mxu0 %v903
        %v1091 = vpop.f32.mrf.mxu0
        %v1092 = vadd.f32 0.0, %v1091
        %v1093 = vpop.f32.mrf.mxu0
        %1094 = vmatprep.mubr.f32.mxu0 0.0
        %1095 = vmatmul.mubr.f32.gmra.mxu0 %v906
        %v1096 = vpop.f32.mrf.mxu0
        %v1097 = vadd.f32 0.0, %v1096
        %v1098 = vpop.f32.mrf.mxu0
        %1099 = vmatprep.mubr.f32.mxu0 0.0
        %1100 = vmatmul.mubr.f32.gmra.mxu0 %v909
        %v1101 = vpop.f32.mrf.mxu0
        %v1102 = vadd.f32 0.0, %v1101
        %v1103 = vpop.f32.mrf.mxu0
        %1104 = vmatprep.mubr.f32.mxu0 0.0
        %1105 = vmatmul.mubr.f32.gmra.mxu0 %v912
        %v1106 = vpop.f32.mrf.mxu0
        %v1107 = vadd.f32 0.0, %v1106
        %v1108 = vpop.f32.mrf.mxu0
        %1109 = vmatprep.mubr.f32.mxu0 0.0
        %1110 = vmatmul.mubr.f32.gmra.mxu0 %v915
        %v1111 = vpop.f32.mrf.mxu0
        %v1112 = vadd.f32 0.0, %v1111
        %v1113 = vpop.f32.mrf.mxu0
        %1114 = vmatprep.mubr.f32.mxu0 0.0
        %1115 = vmatmul.mubr.f32.gmra.mxu0 %v918
        %v1116 = vpop.f32.mrf.mxu0
        %v1117 = vadd.f32 0.0, %v1116
        %v1118 = vpop.f32.mrf.mxu0
        %1119 = vmatprep.mubr.f32.mxu0 0.0
        %1120 = vmatmul.mubr.f32.gmra.mxu0 %v921
        %v1121 = vpop.f32.mrf.mxu0
        %v1122 = vadd.f32 0.0, %v1121
        %v1123 = vpop.f32.mrf.mxu0
        %1124 = vmatprep.mubr.f32.mxu0 0.0
        %1125 = vmatmul.mubr.f32.gmra.mxu0 %v924
        %v1126 = vpop.f32.mrf.mxu0
        %v1127 = vadd.f32 0.0, %v1126
        %v1128 = vpop.f32.mrf.mxu0
        %1129 = vmatprep.mubr.f32.mxu0 0.0
        %1130 = vmatmul.mubr.f32.gmra.mxu0 %v927
        %v1131 = vpop.f32.mrf.mxu0
        %v1132 = vadd.f32 0.0, %v1131
        %v1133 = vpop.f32.mrf.mxu0
        %1134 = vmatprep.mubr.f32.mxu0 0.0
        %1135 = vmatmul.mubr.f32.gmra.mxu0 %v930
        %v1136 = vpop.f32.mrf.mxu0
        %v1137 = vadd.f32 0.0, %v1136
        %v1138 = vpop.f32.mrf.mxu0
        %1139 = vmatprep.mubr.f32.mxu0 0.0
        %1140 = vmatmul.mubr.f32.gmra.mxu0 %v933
        %v1141 = vpop.f32.mrf.mxu0
        %v1142 = vadd.f32 0.0, %v1141
        %v1143 = vpop.f32.mrf.mxu0
        %1144 = vmatprep.mubr.f32.mxu0 0.0
        %1145 = vmatmul.mubr.f32.gmra.mxu0 %v936
        %v1146 = vpop.f32.mrf.mxu0
        %v1147 = vadd.f32 0.0, %v1146
        %v1148 = vpop.f32.mrf.mxu0
        %1149 = vmatprep.mubr.f32.mxu0 0.0
        %1150 = vmatmul.mubr.f32.gmra.mxu0 %v939
        %v1151 = vpop.f32.mrf.mxu0
        %v1152 = vadd.f32 0.0, %v1151
        %v1153 = vpop.f32.mrf.mxu0
        %1154 = vmatprep.mubr.f32.mxu0 0.0
        %1155 = vmatmul.mubr.f32.gmra.mxu0 %v942
        %v1156 = vpop.f32.mrf.mxu0
        %v1157 = vadd.f32 0.0, %v1156
        %v1158 = vpop.f32.mrf.mxu0
        %1159 = vmatprep.mubr.f32.mxu0 0.0
        %1160 = vmatmul.mubr.f32.gmra.mxu0 %v945
        %v1161 = vpop.f32.mrf.mxu0
        %v1162 = vadd.f32 0.0, %v1161
        %v1163 = vpop.f32.mrf.mxu0
        %1164 = vmatprep.mubr.f32.mxu0 0.0
        %1165 = vmatmul.mubr.f32.gmra.mxu0 %v948
        %v1166 = vpop.f32.mrf.mxu0
        %v1167 = vadd.f32 0.0, %v1166
        %v1168 = vpop.f32.mrf.mxu0
        %1169 = vmatprep.mubr.f32.mxu0 0.0
        %1170 = vmatmul.mubr.f32.gmra.mxu0 %v951
        %v1171 = vpop.f32.mrf.mxu0
        %v1172 = vadd.f32 0.0, %v1171
        %v1173 = vpop.f32.mrf.mxu0
        %1174 = vmatprep.mubr.f32.mxu0 0.0
        %1175 = vmatmul.mubr.f32.gmra.mxu0 %v954
        %v1176 = vpop.f32.mrf.mxu0
        %v1177 = vadd.f32 0.0, %v1176
        %v1178 = vpop.f32.mrf.mxu0
        %1179 = vmatprep.mubr.f32.mxu0 0.0
        %1180 = vmatmul.mubr.f32.gmra.mxu0 %v957
        %v1181 = vpop.f32.mrf.mxu0
        %v1182 = vadd.f32 0.0, %v1181
        %v1183 = vpop.f32.mrf.mxu0
        %1184 = vmatprep.mubr.f32.mxu0 0.0
        %1185 = vmatmul.mubr.f32.gmra.mxu0 %v960
        %v1186 = vpop.f32.mrf.mxu0
        %v1187 = vadd.f32 0.0, %v1186
        %v1188 = vpop.f32.mrf.mxu0
        %1189 = vdwg.mxu0
        %v1190 = vadd.f32 %v438, %v1032
        %v1191 = vadd.f32 %v443, %v1037
        %v1192 = vadd.f32 %v448, %v1042
        %v1193 = vadd.f32 %v453, %v1047
        %v1194 = vadd.f32 %v458, %v1052
        %v1195 = vadd.f32 %v463, %v1057
        %v1196 = vadd.f32 %v468, %v1062
        %v1197 = vadd.f32 %v473, %v1067
        %v1198 = vadd.f32 %v478, %v1072
        %v1199 = vadd.f32 %v483, %v1077
        %v1200 = vadd.f32 %v488, %v1082
        %v1201 = vadd.f32 %v493, %v1087
        %v1202 = vadd.f32 %v498, %v1092
        %v1203 = vadd.f32 %v503, %v1097
        %v1204 = vadd.f32 %v508, %v1102
        %v1205 = vadd.f32 %v513, %v1107
        %v1206 = vadd.f32 %v518, %v1112
        %v1207 = vadd.f32 %v523, %v1117
        %v1208 = vadd.f32 %v528, %v1122
        %v1209 = vadd.f32 %v533, %v1127
        %v1210 = vadd.f32 %v538, %v1132
        %v1211 = vadd.f32 %v543, %v1137
        %v1212 = vadd.f32 %v548, %v1142
        %v1213 = vadd.f32 %v553, %v1147
        %v1214 = vadd.f32 %v558, %v1152
        %v1215 = vadd.f32 %v563, %v1157
        %v1216 = vadd.f32 %v568, %v1162
        %v1217 = vadd.f32 %v573, %v1167
        %v1218 = vadd.f32 %v578, %v1172
        %v1219 = vadd.f32 %v583, %v1177
        %v1220 = vadd.f32 %v588, %v1182
        %v1221 = vadd.f32 %v593, %v1187
        %1222 = vst [vmem:[%s218] sm:$0xff] %v1190
        %1223 = vst [vmem:[%s218 + $0x8] sm:$0xff] %v1191
        %1224 = vst [vmem:[%s218 + $0x10] sm:$0xff] %v1192
        %1225 = vst [vmem:[%s218 + $0x18] sm:$0xff] %v1193
        %1226 = vst [vmem:[%s218 + $0x20] sm:$0xff] %v1194
        %1227 = vst [vmem:[%s218 + $0x28] sm:$0xff] %v1195
        %1228 = vst [vmem:[%s218 + $0x30] sm:$0xff] %v1196
        %1229 = vst [vmem:[%s218 + $0x38] sm:$0xff] %v1197
        %1230 = vst [vmem:[%s218 + $0x40] sm:$0xff] %v1198
        %1231 = vst [vmem:[%s218 + $0x48] sm:$0xff] %v1199
        %1232 = vst [vmem:[%s218 + $0x50] sm:$0xff] %v1200
        %1233 = vst [vmem:[%s218 + $0x58] sm:$0xff] %v1201
        %1234 = vst [vmem:[%s218 + $0x60] sm:$0xff] %v1202
        %1235 = vst [vmem:[%s218 + $0x68] sm:$0xff] %v1203
        %1236 = vst [vmem:[%s218 + $0x70] sm:$0xff] %v1204
        %1237 = vst [vmem:[%s218 + $0x78] sm:$0xff] %v1205
        %1238 = vst [vmem:[%s218 + $0x80] sm:$0xff] %v1206
        %1239 = vst [vmem:[%s218 + $0x88] sm:$0xff] %v1207
        %1240 = vst [vmem:[%s218 + $0x90] sm:$0xff] %v1208
        %1241 = vst [vmem:[%s218 + $0x98] sm:$0xff] %v1209
        %1242 = vst [vmem:[%s218 + $0xa0] sm:$0xff] %v1210
        %1243 = vst [vmem:[%s218 + $0xa8] sm:$0xff] %v1211
        %1244 = vst [vmem:[%s218 + $0xb0] sm:$0xff] %v1212
        %1245 = vst [vmem:[%s218 + $0xb8] sm:$0xff] %v1213
        %1246 = vst [vmem:[%s218 + $0xc0] sm:$0xff] %v1214
        %1247 = vst [vmem:[%s218 + $0xc8] sm:$0xff] %v1215
        %1248 = vst [vmem:[%s218 + $0xd0] sm:$0xff] %v1216
        %1249 = vst [vmem:[%s218 + $0xd8] sm:$0xff] %v1217
        %1250 = vst [vmem:[%s218 + $0xe0] sm:$0xff] %v1218
        %1251 = vst [vmem:[%s218 + $0xe8] sm:$0xff] %v1219
        %1252 = vst [vmem:[%s218 + $0xf0] sm:$0xff] %v1220
        %1253 = vst [vmem:[%s218 + $0xf8] sm:$0xff] %v1221
        %s1254 = sand.u32 %s137, 1
        %s1255 = scalar_lea.sflag [#allocation3], %s1254
        %s1256 = sand.u32 %s137, 1
        %s1257 = smul.addr %s1256, 256
        %s1258 = scalar_lea.vmem [#allocation2], %s1257
        // Predicated region
        $region41: #{tpu_custom_call.1} parent=39 // pred_check
          %p1259 = pneg %p147
        $region42: #{tpu_custom_call.1} parent=39 // pred_check_branch
          %1261 = sbr.rel (%p1259) target = $region44
        $region43: #{tpu_custom_call.1} parent=39 // pred_region
          %s1262 = smul.u32 32, %s19
          %s1264 = ssub.s32 4096, 4096
          %1265 = vsyncadd %s1255, %s1264
          %s1266 = smul.addr %s1262, 128
          %s1267 = scalar_lea.hbm %s5, %s1266
          %s1268 = sshll.u32 %s1258, 4
          %s1269 = int_to_ptr.vmem [resolvable:$true] %s1268
          %1274 = dma.vmem_to_hbm [thread:$0]  %s1269, 4096, %s1267, %s1255, 128, 128, 8
        $region44: #{tpu_custom_call.1} parent=39 // pred_fallthru
          _
      $region40: #{tpu_custom_call.1} parent=5 // pred_fallthru
        _
      %p1275 = scmp.le.s32.totalorder 2, %s14
      // Predicated region
      $region45: #{tpu_custom_call.1} parent=5 // pred_check
        %p1276 = pneg %p1275
      $region46: #{tpu_custom_call.1} parent=5 // pred_check_branch
        %1278 = sbr.rel (%p1276) target = $region48
      $region47: #{tpu_custom_call.1} parent=5 // pred_region
        %s1279 = ssub.s32 %s14, 2
        // Predicated region
        $region49: #{tpu_custom_call.1} parent=47 // pred_check
          %p1280 = pneg %p153
        $region50: #{tpu_custom_call.1} parent=47 // pred_check_branch
          %1282 = sbr.rel (%p1280) target = $region52
        $region51: #{tpu_custom_call.1} parent=47 // pred_region
          %s1283 = sand.u32 %s138, 1
          %s1284 = scalar_lea.sflag [#allocation3], %s1283
          %s1285 = sand.u32 %s138, 1
          %s1286 = smul.addr %s1285, 256
          %s1287 = scalar_lea.vmem [#allocation2], %s1286
          %1288 = dma.done %s1284, 4096
        $region52: #{tpu_custom_call.1} parent=47 // pred_fallthru
          _
      $region48: #{tpu_custom_call.1} parent=5 // pred_fallthru
        _
    $region6: #{tpu_custom_call.1} parent=1 // loop_footer
      %s18 = sadd.s32 1, %s14
    $region7: #{tpu_custom_call.1} parent=1 // loop_footer_branch
      %13 = sbr.rel target = $region3
    $region8: #{tpu_custom_call.1} parent=1 // loop_exit
      _
    %1289 = vsyncpa [#allocation3], 1
    %s1290 = scalar_lea.sflag [#allocation3], 1
    %1291 = vsyncpa %s1290, 1

</llo_original>
